<compile_context>
chip_gen: v7x
topology: tpu7x:2x2x1
jax: 0.10.0
libtpu: 0.0.40
codegen_flags: <defaults>
</compile_context>

<pallas_src>
import jax
import jax.numpy as jnp
from jax.experimental import pallas as pl
from jax.experimental.pallas import tpu as pltpu


def _conv1d_alpha_residual_kernel(alpha_ref,                 # SMEM (1,)
                                  x_ref,                     # VMEM (N, Cp) f32
                                  keep_prev_ref,             # VMEM (N, 1)  f32 0/1
                                  keep_next_ref,             # VMEM (N, 1)  f32 0/1
                                  w1_ref, b1_ref,            # VMEM (3Cp, Cp) bf16, (1, Cp) f32
                                  w2_ref, b2_ref,            # VMEM (3Cp, Cp) bf16, (1, Cp) f32
                                  o_ref):                    # VMEM (N, Cp) f32
    x = x_ref[...]                                           # (N, Cp) f32, N = B*L
    n_rows = x.shape[0]

    # Hoisted halo masks: zero out rows whose shifted neighbour either wrapped
    # around (roll) or belongs to a different batch element.
    keep_prev = keep_prev_ref[...]                           # (N, 1)
    keep_next = keep_next_ref[...]                           # (N, 1)

    def conv_k3(h, w_ref, b_ref):
        # h: (N, Cp) f32, already ReLU'd.  Build the 3-tap window on the lane
        # axis and hit the MXU once with a K = 3*Cp bf16 matmul, f32 accumulate.
        h_prev = pltpu.roll(h, shift=1, axis=0) * keep_prev           # h[l-1]
        h_next = pltpu.roll(h, shift=n_rows - 1, axis=0) * keep_next  # h[l+1]
        window = jnp.concatenate([h_prev, h, h_next], axis=-1)        # (N, 3Cp)
        y = jnp.dot(window.astype(jnp.bfloat16), w_ref[...],
                    preferred_element_type=jnp.float32)               # (N, Cp) f32
        return y + b_ref[...]

    h1 = jnp.maximum(x, 0.0)                 # ReLU
    y1 = conv_k3(h1, w1_ref, b1_ref)         # Conv1d #1
    h2 = jnp.maximum(y1, 0.0)                # ReLU
    y2 = conv_k3(h2, w2_ref, b2_ref)         # Conv1d #2

    alpha = alpha_ref[0]
    o_ref[...] = x + alpha * y2              # residual with learned alpha (f32)


def conv1d_alpha_residual(x_ncw, w1, b1, w2, b2, alpha):
    """Forward pass of Conv1dAlphaResidual (initial_relu=True).

    x_ncw : (B, C, L) float32   -- PyTorch NCW layout
    w1,w2 : (C, C, 3) float32   -- PyTorch Conv1d weight (C_out, C_in, k)
    b1,b2 : (C,)      float32
    alpha : (1,)      float32
    returns (B, C, L) float32
    """
    B, C, L = x_ncw.shape
    Cp = max(128, ((C + 127) // 128) * 128)   # lane-dense channel padding
    N = B * L

    def prep_weight(w):
        wk = jnp.transpose(w, (2, 1, 0))                       # (3, C_in, C_out); k=0 <-> x[l-1]
        wk = jnp.pad(wk, ((0, 0), (0, Cp - C), (0, Cp - C)))   # zero-padded channels
        return wk.reshape(3 * Cp, Cp).astype(jnp.bfloat16)     # stacked [W0; W1; W2]

    def prep_bias(b):
        return jnp.pad(b, (0, Cp - C)).reshape(1, Cp).astype(jnp.float32)

    # NCW -> channels-last rows (B*L, Cp): C on the 128-lane axis.
    x_rows = jnp.pad(jnp.transpose(x_ncw, (0, 2, 1)),
                     ((0, 0), (0, 0), (0, Cp - C))).reshape(N, Cp).astype(jnp.float32)

    # Static halo masks for the flattened batch: kill h[l-1] at l==0 and
    # h[l+1] at l==L-1 of every batch element (also kills the roll wrap-around).
    pos = jnp.arange(N, dtype=jnp.int32) % L
    keep_prev = (pos != 0).astype(jnp.float32).reshape(N, 1)
    keep_next = (pos != L - 1).astype(jnp.float32).reshape(N, 1)

    out_rows = pl.pallas_call(
        _conv1d_alpha_residual_kernel,
        out_shape=jax.ShapeDtypeStruct((N, Cp), jnp.float32),
        in_specs=[
            pl.BlockSpec(memory_space=pltpu.SMEM),   # alpha (scalar)
            pl.BlockSpec(memory_space=pltpu.VMEM),   # x rows
            pl.BlockSpec(memory_space=pltpu.VMEM),   # keep_prev mask
            pl.BlockSpec(memory_space=pltpu.VMEM),   # keep_next mask
            pl.BlockSpec(memory_space=pltpu.VMEM),   # w1 stacked (bf16)
            pl.BlockSpec(memory_space=pltpu.VMEM),   # b1
            pl.BlockSpec(memory_space=pltpu.VMEM),   # w2 stacked (bf16)
            pl.BlockSpec(memory_space=pltpu.VMEM),   # b2
        ],
        out_specs=pl.BlockSpec(memory_space=pltpu.VMEM),
    )(alpha.astype(jnp.float32), x_rows, keep_prev, keep_next,
      prep_weight(w1), prep_bias(b1), prep_weight(w2), prep_bias(b2))

    out = out_rows.reshape(B, L, Cp)[:, :, :C]      # drop padded channels
    return jnp.transpose(out, (0, 2, 1))            # back to (B, C, L)


def _reference_jax(x_ncw, w1, b1, w2, b2, alpha):
    """Pure-JAX f32 reference with PyTorch Conv1d semantics (NCW layout)."""
    def conv1d(h, w, b):
        y = jax.lax.conv_general_dilated(
            h, w, window_strides=(1,), padding=((1, 1),),
            dimension_numbers=('NCH', 'OIH', 'NCH'))
        return y + b[None, :, None]
    h = jax.nn.relu(x_ncw)
    y1 = conv1d(h, w1, b1)
    y2 = conv1d(jax.nn.relu(y1), w2, b2)
    return x_ncw + alpha[0] * y2


if __name__ == "__main__":
    B, C, L = 2, 32, 16          # batch, num_hidden channels, sequence length
    alpha_init = 1e-16

    key = jax.random.PRNGKey(0)
    kx, kw1, kb1, kw2, kb2 = jax.random.split(key, 5)

    x_ncw = jax.random.normal(kx, (B, C, L), dtype=jnp.float32)

    # PyTorch Conv1d parameter shapes.
    w1 = 0.1 * jax.random.normal(kw1, (C, C, 3), dtype=jnp.float32)
    w2 = 0.1 * jax.random.normal(kw2, (C, C, 3), dtype=jnp.float32)
    b1 = 0.1 * jax.random.normal(kb1, (C,), dtype=jnp.float32)
    b2 = 0.1 * jax.random.normal(kb2, (C,), dtype=jnp.float32)
    # Make alpha large enough that the conv branch is numerically visible.
    alpha = jnp.array([alpha_init + 0.5], dtype=jnp.float32)

    out = conv1d_alpha_residual(x_ncw, w1, b1, w2, b2, alpha)
    out = jax.block_until_ready(out)

    ref = _reference_jax(x_ncw, w1, b1, w2, b2, alpha)
    assert out.shape == (B, C, L)
    # bf16 matmul operands (f32 accumulation) -> loose-ish tolerance vs f32 ref.
    assert jnp.allclose(out, ref, atol=5e-2, rtol=5e-2), "mismatch vs reference"

    print("KERNEL_OK")
</pallas_src>

<mosaic_0001>
module attributes {stable_mosaic.version = 11 : i64} {
  func.func @_conv1d_alpha_residual_kernel(%arg0: memref<1xf32, #tpu.memory_space<smem>>, %arg1: memref<32x128xf32, #tpu.memory_space<vmem>>, %arg2: memref<32x1xf32, #tpu.memory_space<vmem>>, %arg3: memref<32x1xf32, #tpu.memory_space<vmem>>, %arg4: memref<384x128xbf16, #tpu.memory_space<vmem>>, %arg5: memref<1x128xf32, #tpu.memory_space<vmem>>, %arg6: memref<384x128xbf16, #tpu.memory_space<vmem>>, %arg7: memref<1x128xf32, #tpu.memory_space<vmem>>, %arg8: memref<32x128xf32, #tpu.memory_space<vmem>>) attributes {dimension_semantics = [], scalar_prefetch = 0 : i64, scratch_operands = 0 : i64, tpu.core_type = #tpu.core_type<tc>} {
    %c0 = arith.constant 0 : index
    %c0_0 = arith.constant 0 : index
    %0 = vector.load %arg1[%c0, %c0_0] : memref<32x128xf32, #tpu.memory_space<vmem>>, vector<32x128xf32>
    %c0_1 = arith.constant 0 : index
    %c0_2 = arith.constant 0 : index
    %1 = vector.load %arg2[%c0_1, %c0_2] : memref<32x1xf32, #tpu.memory_space<vmem>>, vector<32x1xf32>
    %c0_3 = arith.constant 0 : index
    %c0_4 = arith.constant 0 : index
    %2 = vector.load %arg3[%c0_3, %c0_4] : memref<32x1xf32, #tpu.memory_space<vmem>>, vector<32x1xf32>
    %cst = arith.constant 0.000000e+00 : f32
    %3 = vector.broadcast %cst : f32 to vector<32x128xf32>
    %4 = arith.maximumf %0, %3 : vector<32x128xf32>
    %c1_i32 = arith.constant 1 : i32
    %5 = tpu.dynamic_rotate %4 by %c1_i32 dim 0 : vector<32x128xf32>, i32 -> vector<32x128xf32>
    %6 = vector.broadcast %1 : vector<32x1xf32> to vector<32x128xf32>
    %7 = arith.mulf %5, %6 : vector<32x128xf32>
    %c31_i32 = arith.constant 31 : i32
    %8 = tpu.dynamic_rotate %4 by %c31_i32 dim 0 : vector<32x128xf32>, i32 -> vector<32x128xf32>
    %9 = vector.broadcast %2 : vector<32x1xf32> to vector<32x128xf32>
    %10 = arith.mulf %8, %9 : vector<32x128xf32>
    %11 = tpu.concatenate %7, %4, %10 in 1 : vector<32x128xf32>, vector<32x128xf32>, vector<32x128xf32> -> vector<32x384xf32>
    %12 = arith.truncf %11 : vector<32x384xf32> to vector<32x384xbf16>
    %c0_5 = arith.constant 0 : index
    %c0_6 = arith.constant 0 : index
    %13 = vector.load %arg4[%c0_5, %c0_6] : memref<384x128xbf16, #tpu.memory_space<vmem>>, vector<384x128xbf16>
    %cst_7 = arith.constant dense<0.000000e+00> : vector<32x128xf32>
    %14 = tpu.matmul %12, %13, %cst_7 {dimension_numbers = #tpu.dot_dimension_numbers<[1], [0], [0], [1], [0, 0, 1, 1], [], []>} : vector<32x384xbf16>, vector<384x128xbf16>, vector<32x128xf32> -> vector<32x128xf32>
    %c0_8 = arith.constant 0 : index
    %c0_9 = arith.constant 0 : index
    %15 = vector.load %arg5[%c0_8, %c0_9] : memref<1x128xf32, #tpu.memory_space<vmem>>, vector<1x128xf32>
    %16 = vector.broadcast %15 : vector<1x128xf32> to vector<32x128xf32>
    %17 = arith.addf %14, %16 : vector<32x128xf32>
    %cst_10 = arith.constant 0.000000e+00 : f32
    %18 = vector.broadcast %cst_10 : f32 to vector<32x128xf32>
    %19 = arith.maximumf %17, %18 : vector<32x128xf32>
    %c1_i32_11 = arith.constant 1 : i32
    %20 = tpu.dynamic_rotate %19 by %c1_i32_11 dim 0 : vector<32x128xf32>, i32 -> vector<32x128xf32>
    %21 = vector.broadcast %1 : vector<32x1xf32> to vector<32x128xf32>
    %22 = arith.mulf %20, %21 : vector<32x128xf32>
    %c31_i32_12 = arith.constant 31 : i32
    %23 = tpu.dynamic_rotate %19 by %c31_i32_12 dim 0 : vector<32x128xf32>, i32 -> vector<32x128xf32>
    %24 = vector.broadcast %2 : vector<32x1xf32> to vector<32x128xf32>
    %25 = arith.mulf %23, %24 : vector<32x128xf32>
    %26 = tpu.concatenate %22, %19, %25 in 1 : vector<32x128xf32>, vector<32x128xf32>, vector<32x128xf32> -> vector<32x384xf32>
    %27 = arith.truncf %26 : vector<32x384xf32> to vector<32x384xbf16>
    %c0_13 = arith.constant 0 : index
    %c0_14 = arith.constant 0 : index
    %28 = vector.load %arg6[%c0_13, %c0_14] : memref<384x128xbf16, #tpu.memory_space<vmem>>, vector<384x128xbf16>
    %cst_15 = arith.constant dense<0.000000e+00> : vector<32x128xf32>
    %29 = tpu.matmul %27, %28, %cst_15 {dimension_numbers = #tpu.dot_dimension_numbers<[1], [0], [0], [1], [0, 0, 1, 1], [], []>} : vector<32x384xbf16>, vector<384x128xbf16>, vector<32x128xf32> -> vector<32x128xf32>
    %c0_16 = arith.constant 0 : index
    %c0_17 = arith.constant 0 : index
    %30 = vector.load %arg7[%c0_16, %c0_17] : memref<1x128xf32, #tpu.memory_space<vmem>>, vector<1x128xf32>
    %31 = vector.broadcast %30 : vector<1x128xf32> to vector<32x128xf32>
    %32 = arith.addf %29, %31 : vector<32x128xf32>
    %c0_18 = arith.constant 0 : index
    %33 = memref.load %arg0[%c0_18] : memref<1xf32, #tpu.memory_space<smem>>
    %34 = vector.broadcast %33 : f32 to vector<32x128xf32>
    %35 = arith.mulf %34, %32 : vector<32x128xf32>
    %36 = arith.addf %0, %35 : vector<32x128xf32>
    %c0_19 = arith.constant 0 : index
    %c0_20 = arith.constant 0 : index
    %37 = vector.load %arg8[%c0_19, %c0_20] : memref<32x128xf32, #tpu.memory_space<vmem>>, vector<32x128xf32>
    tpu.vector_store %arg8[%c0_19, %c0_20], %36 {strides = array<i32>} : memref<32x128xf32, #tpu.memory_space<vmem>>, vector<32x128xf32>,
    return
  }
}

</mosaic_0001>

<llo_original>
// kernel: tpu_custom_call.1
$region0: #{tpu_custom_call.1}
  #allocation0 [shape = 'u32[]', space=smem, size = 0x4, offset = 0x4, fixed_abs, tag = 'smem constant byte address 0x4 - core index']
  #allocation1 [shape = 'u32[144,128]{1,0:T(1,128)}', space=vmem, size = 0x12000, scoped, tag = 'internal scratch']
  #allocation2 [shape = 'f32[1]{0:T(128)S(6)}', space=smem, size = 0x200, scoped, tag = 'scoped memory for tpu_custom_call.1']
  %s0 = inlined_call_operand.<no memory space> [shape: f32[1], index: 0, kind: input, shape index: {}]
  %s1 = inlined_call_operand.vmem [shape: f32[32,128], index: 1, kind: input, shape index: {}]
  %s2 = inlined_call_operand.vmem [shape: f32[32,1], index: 2, kind: input, shape index: {}]
  %s3 = inlined_call_operand.vmem [shape: f32[32,1], index: 3, kind: input, shape index: {}]
  %s4 = inlined_call_operand.hbm [shape: bf16[384,128], index: 4, kind: input, shape index: {}]
  %s5 = inlined_call_operand.vmem [shape: f32[1,128], index: 5, kind: input, shape index: {}]
  %s6 = inlined_call_operand.hbm [shape: bf16[384,128], index: 6, kind: input, shape index: {}]
  %s7 = inlined_call_operand.vmem [shape: f32[1,128], index: 7, kind: input, shape index: {}]
  %s8 = inlined_call_operand.hbm [shape: f32[32,128], index: 8, kind: output, shape index: {}]
  %s9 = sld [smem:[#allocation0]]
  $region50: #{tpu_custom_call.1} parent=0
    _
  %s11 = ssub.s32 1, %s9
  %s12 = scalar_select 0, %s11, %s9
  %13 = sst [smem:[#allocation2]] %s0
  $region1: #{tpu_custom_call.1} parent=0
    #allocation3 [shape = 'u8[98304]{0}', space=vmem, size = 0x18000, scoped, tag = 'input window, operand 4, single buffered']
    #allocation4 [shape = 's32[1]{0}', space=sflag, size = 0x4, scoped, tag = 'scoped memory for tpu_custom_call.1']
    #allocation5 [shape = 's32[1]{0}', space=sflag, size = 0x4, scoped, tag = 'scoped memory for tpu_custom_call.1']
    #allocation6 [shape = 'u8[98304]{0}', space=vmem, size = 0x18000, scoped, tag = 'input window, operand 6, single buffered']
    #allocation7 [shape = 's32[1]{0}', space=sflag, size = 0x4, scoped, tag = 'scoped memory for tpu_custom_call.1']
    #allocation8 [shape = 'u8[16384]{0}', space=vmem, size = 0x4000, scoped, tag = 'output window, operand 0, single buffered']
    %14 = vsyncpa [#allocation4], 0
    %15 = vsyncpa [#allocation7], 0
    %16 = vsyncpa [#allocation5], 0
    // Predicated region
    $region2: #{tpu_custom_call.1} parent=1 // pred_check
      _
    $region3: #{tpu_custom_call.1} parent=1 // pred_check_branch
      %18 = sbr.rel (0) target = $region5
    $region4: #{tpu_custom_call.1} parent=1 // pred_region
      _
    $region5: #{tpu_custom_call.1} parent=1 // pred_fallthru
      _
    // Predicated region
    $region6: #{tpu_custom_call.1} parent=1 // pred_check
      _
    $region7: #{tpu_custom_call.1} parent=1 // pred_check_branch
      %20 = sbr.rel (0) target = $region9
    $region8: #{tpu_custom_call.1} parent=1 // pred_region
      _
    $region9: #{tpu_custom_call.1} parent=1 // pred_fallthru
      _
    // Predicated region
    $region10: #{tpu_custom_call.1} parent=1 // pred_check
      _
    $region11: #{tpu_custom_call.1} parent=1 // pred_check_branch
      %22 = sbr.rel (0) target = $region13
    $region12: #{tpu_custom_call.1} parent=1 // pred_region
      _
    $region13: #{tpu_custom_call.1} parent=1 // pred_fallthru
      _
    // Predicated region
    $region14: #{tpu_custom_call.1} parent=1 // pred_check
      _
    $region15: #{tpu_custom_call.1} parent=1 // pred_check_branch
      %24 = sbr.rel (0) target = $region17
    $region16: #{tpu_custom_call.1} parent=1 // pred_region
      _
    $region17: #{tpu_custom_call.1} parent=1 // pred_fallthru
      _
    // Predicated region
    $region18: #{tpu_custom_call.1} parent=1 // pred_check
      _
    $region19: #{tpu_custom_call.1} parent=1 // pred_check_branch
      %26 = sbr.rel (0) target = $region21
    $region20: #{tpu_custom_call.1} parent=1 // pred_region
      %s28 = ssub.s32 3072, 3072
      %29 = vsyncadd [#allocation4], %s28
      %s30 = sshll.u32 [#allocation3], 4
      %s31 = int_to_ptr.vmem [resolvable:$true] %s30
      %36 = dma.hbm_to_vmem [thread:$0]  %s4, 3072, %s31, [#allocation4], 64, 64, 4
    $region21: #{tpu_custom_call.1} parent=1 // pred_fallthru
      _
    // Predicated region
    $region22: #{tpu_custom_call.1} parent=1 // pred_check
      _
    $region23: #{tpu_custom_call.1} parent=1 // pred_check_branch
      %38 = sbr.rel (0) target = $region25
    $region24: #{tpu_custom_call.1} parent=1 // pred_region
      _
    $region25: #{tpu_custom_call.1} parent=1 // pred_fallthru
      _
    // Predicated region
    $region26: #{tpu_custom_call.1} parent=1 // pred_check
      _
    $region27: #{tpu_custom_call.1} parent=1 // pred_check_branch
      %40 = sbr.rel (0) target = $region29
    $region28: #{tpu_custom_call.1} parent=1 // pred_region
      %s42 = ssub.s32 3072, 3072
      %43 = vsyncadd [#allocation7], %s42
      %s44 = sshll.u32 [#allocation6], 4
      %s45 = int_to_ptr.vmem [resolvable:$true] %s44
      %50 = dma.hbm_to_vmem [thread:$0]  %s6, 3072, %s45, [#allocation7], 64, 64, 4
    $region29: #{tpu_custom_call.1} parent=1 // pred_fallthru
      _
    // Predicated region
    $region30: #{tpu_custom_call.1} parent=1 // pred_check
      _
    $region31: #{tpu_custom_call.1} parent=1 // pred_check_branch
      %52 = sbr.rel (0) target = $region33
    $region32: #{tpu_custom_call.1} parent=1 // pred_region
      _
    $region33: #{tpu_custom_call.1} parent=1 // pred_fallthru
      _
    // Predicated region
    $region34: #{tpu_custom_call.1} parent=1 // pred_check
      _
    $region35: #{tpu_custom_call.1} parent=1 // pred_check_branch
      %54 = sbr.rel (0) target = $region37
    $region36: #{tpu_custom_call.1} parent=1 // pred_region
      %55 = dma.done [#allocation4], 3072
    $region37: #{tpu_custom_call.1} parent=1 // pred_fallthru
      _
    // Predicated region
    $region38: #{tpu_custom_call.1} parent=1 // pred_check
      _
    $region39: #{tpu_custom_call.1} parent=1 // pred_check_branch
      %57 = sbr.rel (0) target = $region41
    $region40: #{tpu_custom_call.1} parent=1 // pred_region
      %58 = dma.done [#allocation7], 3072
    $region41: #{tpu_custom_call.1} parent=1 // pred_fallthru
      _
    %v60 = vld [vmem:[%s1] sm:$0xff]
    %v61 = vld [vmem:[%s1 + $0x8] sm:$0xff]
    %v62 = vld [vmem:[%s1 + $0x10] sm:$0xff]
    %v63 = vld [vmem:[%s1 + $0x18] sm:$0xff]
    %v64 = vld [vmem:[%s2] sm:$0xff]
    %v65 = vld [vmem:[%s2 + $0x8] sm:$0xff]
    %v66 = vld [vmem:[%s2 + $0x10] sm:$0xff]
    %v67 = vld [vmem:[%s2 + $0x18] sm:$0xff]
    %v68 = vld [vmem:[%s3] sm:$0xff]
    %v69 = vld [vmem:[%s3 + $0x8] sm:$0xff]
    %v70 = vld [vmem:[%s3 + $0x10] sm:$0xff]
    %v71 = vld [vmem:[%s3 + $0x18] sm:$0xff]
    %v72 = vmax.f32 %v60, 0.0
    %v73 = vmax.f32 %v61, 0.0
    %v74 = vmax.f32 %v62, 0.0
    %v75 = vmax.f32 %v63, 0.0
    %v76 = vrot.slane %v72, 7
    %v77 = vrot.slane %v73, 7
    %v78 = vrot.slane %v74, 7
    %v79 = vrot.slane %v75, 7
    %v80 = vlaneseq
    %v81 = vshrl.u32 %v80, 7
    %vm82 = vcmp.lt.s32.totalorder %v81, 1
    %v83 = vsel %vm82, %v78, %v79
    %v84 = vsel %vm82, %v77, %v78
    %v85 = vsel %vm82, %v76, %v77
    %v86 = vsel %vm82, %v79, %v76
    %88 = vset.pattern.permute.xlu0 0
    %89 = vperm.xlu0 %88, %v64
    %v90 = vpop.permute.xlu0 %89
    %93 = vset.pattern.permute.xlu0 0
    %94 = vperm.xlu0 %93, %v65
    %v95 = vpop.permute.xlu0 %94
    %98 = vset.pattern.permute.xlu0 0
    %99 = vperm.xlu0 %98, %v66
    %v100 = vpop.permute.xlu0 %99
    %103 = vset.pattern.permute.xlu0 0
    %104 = vperm.xlu0 %103, %v67
    %v105 = vpop.permute.xlu0 %104
    %v107 = vmul.f32 %v86, %v90
    %v108 = vmul.f32 %v85, %v95
    %v109 = vmul.f32 %v84, %v100
    %v110 = vmul.f32 %v83, %v105
    %v111 = vrot.slane %v72, 1
    %v112 = vrot.slane %v73, 1
    %v113 = vrot.slane %v74, 1
    %v114 = vrot.slane %v75, 1
    %vm115 = vcmp.lt.s32.totalorder %v81, 7
    %v116 = vsel %vm115, %v113, %v114
    %v117 = vsel %vm115, %v112, %v113
    %v118 = vsel %vm115, %v111, %v112
    %v119 = vsel %vm115, %v114, %v111
    %121 = vset.pattern.permute.xlu0 0
    %122 = vperm.xlu0 %121, %v68
    %v123 = vpop.permute.xlu0 %122
    %126 = vset.pattern.permute.xlu0 0
    %127 = vperm.xlu0 %126, %v69
    %v128 = vpop.permute.xlu0 %127
    %131 = vset.pattern.permute.xlu0 0
    %132 = vperm.xlu0 %131, %v70
    %v133 = vpop.permute.xlu0 %132
    %136 = vset.pattern.permute.xlu0 0
    %137 = vperm.xlu0 %136, %v71
    %v138 = vpop.permute.xlu0 %137
    %v140 = vmul.f32 %v118, %v123
    %v141 = vmul.f32 %v117, %v128
    %v142 = vmul.f32 %v116, %v133
    %v143 = vmul.f32 %v119, %v138
    %v144 = vpack.c.bf16 %v108, %v107
    %v145 = vpack.c.bf16 %v73, %v72
    %v146 = vpack.c.bf16 %v141, %v140
    %v147 = vpack.c.bf16 %v110, %v109
    %v148 = vpack.c.bf16 %v75, %v74
    %v149 = vpack.c.bf16 %v143, %v142
    %v150 = vld [vmem:[#allocation3] sm:$0xf]
    %v151 = vld [vmem:[#allocation3 + $0x4] sm:$0xf]
    %v152 = vld [vmem:[#allocation3 + $0x8] sm:$0xf]
    %v153 = vld [vmem:[#allocation3 + $0xc] sm:$0xf]
    %v154 = vld [vmem:[#allocation3 + $0x10] sm:$0xf]
    %v155 = vld [vmem:[#allocation3 + $0x14] sm:$0xf]
    %v156 = vld [vmem:[#allocation3 + $0x18] sm:$0xf]
    %v157 = vld [vmem:[#allocation3 + $0x1c] sm:$0xf]
    %v158 = vld [vmem:[#allocation3 + $0x20] sm:$0xf]
    %v159 = vld [vmem:[#allocation3 + $0x24] sm:$0xf]
    %v160 = vld [vmem:[#allocation3 + $0x28] sm:$0xf]
    %v161 = vld [vmem:[#allocation3 + $0x2c] sm:$0xf]
    %v162 = vld [vmem:[#allocation3 + $0x30] sm:$0xf]
    %v163 = vld [vmem:[#allocation3 + $0x34] sm:$0xf]
    %v164 = vld [vmem:[#allocation3 + $0x38] sm:$0xf]
    %v165 = vld [vmem:[#allocation3 + $0x3c] sm:$0xf]
    %v166 = vld [vmem:[#allocation3 + $0x40] sm:$0xf]
    %v167 = vld [vmem:[#allocation3 + $0x44] sm:$0xf]
    %v168 = vld [vmem:[#allocation3 + $0x48] sm:$0xf]
    %v169 = vld [vmem:[#allocation3 + $0x4c] sm:$0xf]
    %v170 = vld [vmem:[#allocation3 + $0x50] sm:$0xf]
    %v171 = vld [vmem:[#allocation3 + $0x54] sm:$0xf]
    %v172 = vld [vmem:[#allocation3 + $0x58] sm:$0xf]
    %v173 = vld [vmem:[#allocation3 + $0x5c] sm:$0xf]
    %v174 = vld [vmem:[#allocation3 + $0x60] sm:$0xf]
    %v175 = vld [vmem:[#allocation3 + $0x64] sm:$0xf]
    %v176 = vld [vmem:[#allocation3 + $0x68] sm:$0xf]
    %v177 = vld [vmem:[#allocation3 + $0x6c] sm:$0xf]
    %v178 = vld [vmem:[#allocation3 + $0x70] sm:$0xf]
    %v179 = vld [vmem:[#allocation3 + $0x74] sm:$0xf]
    %v180 = vld [vmem:[#allocation3 + $0x78] sm:$0xf]
    %v181 = vld [vmem:[#allocation3 + $0x7c] sm:$0xf]
    %v182 = vld [vmem:[#allocation3 + $0x80] sm:$0xf]
    %v183 = vld [vmem:[#allocation3 + $0x84] sm:$0xf]
    %v184 = vld [vmem:[#allocation3 + $0x88] sm:$0xf]
    %v185 = vld [vmem:[#allocation3 + $0x8c] sm:$0xf]
    %v186 = vld [vmem:[#allocation3 + $0x90] sm:$0xf]
    %v187 = vld [vmem:[#allocation3 + $0x94] sm:$0xf]
    %v188 = vld [vmem:[#allocation3 + $0x98] sm:$0xf]
    %v189 = vld [vmem:[#allocation3 + $0x9c] sm:$0xf]
    %v190 = vld [vmem:[#allocation3 + $0xa0] sm:$0xf]
    %v191 = vld [vmem:[#allocation3 + $0xa4] sm:$0xf]
    %v192 = vld [vmem:[#allocation3 + $0xa8] sm:$0xf]
    %v193 = vld [vmem:[#allocation3 + $0xac] sm:$0xf]
    %v194 = vld [vmem:[#allocation3 + $0xb0] sm:$0xf]
    %v195 = vld [vmem:[#allocation3 + $0xb4] sm:$0xf]
    %v196 = vld [vmem:[#allocation3 + $0xb8] sm:$0xf]
    %v197 = vld [vmem:[#allocation3 + $0xbc] sm:$0xf]
    %v198 = vld [vmem:[%s5] sm:$0x1]
    %v200 = vlaneseq
    %v201 = vshrl.u32 %v200, 7
    %v202 = vsub.s32 0, %v201
    %v203 = vrot.slane %v198, %v202
    %v253 = vunpack.c.l.b16 %v150
    %v254 = vunpack.c.l.b16 %v151
    %v255 = vunpack.c.l.b16 %v152
    %v256 = vunpack.c.l.b16 %v153
    %v257 = vunpack.c.l.b16 %v154
    %v258 = vunpack.c.l.b16 %v155
    %v259 = vunpack.c.l.b16 %v156
    %v260 = vunpack.c.l.b16 %v157
    %v261 = vunpack.c.l.b16 %v158
    %v262 = vunpack.c.l.b16 %v159
    %v263 = vunpack.c.l.b16 %v160
    %v264 = vunpack.c.l.b16 %v161
    %v265 = vunpack.c.l.b16 %v162
    %v266 = vunpack.c.l.b16 %v163
    %v267 = vunpack.c.l.b16 %v164
    %v268 = vunpack.c.l.b16 %v165
    %v269 = vunpack.c.l.b16 %v166
    %v270 = vunpack.c.l.b16 %v167
    %v271 = vunpack.c.l.b16 %v168
    %v272 = vunpack.c.l.b16 %v169
    %v273 = vunpack.c.l.b16 %v170
    %v274 = vunpack.c.l.b16 %v171
    %v275 = vunpack.c.l.b16 %v172
    %v276 = vunpack.c.l.b16 %v173
    %v277 = vunpack.c.l.b16 %v174
    %v278 = vunpack.c.l.b16 %v175
    %v279 = vunpack.c.l.b16 %v176
    %v280 = vunpack.c.l.b16 %v177
    %v281 = vunpack.c.l.b16 %v178
    %v282 = vunpack.c.l.b16 %v179
    %v283 = vunpack.c.l.b16 %v180
    %v284 = vunpack.c.l.b16 %v181
    %v285 = vunpack.c.l.b16 %v182
    %v286 = vunpack.c.l.b16 %v183
    %v287 = vunpack.c.l.b16 %v184
    %v288 = vunpack.c.l.b16 %v185
    %v289 = vunpack.c.l.b16 %v186
    %v290 = vunpack.c.l.b16 %v187
    %v291 = vunpack.c.l.b16 %v188
    %v292 = vunpack.c.l.b16 %v189
    %v293 = vunpack.c.l.b16 %v190
    %v294 = vunpack.c.l.b16 %v191
    %v295 = vunpack.c.l.b16 %v192
    %v296 = vunpack.c.l.b16 %v193
    %v297 = vunpack.c.l.b16 %v194
    %v298 = vunpack.c.l.b16 %v195
    %v299 = vunpack.c.l.b16 %v196
    %v300 = vunpack.c.l.b16 %v197
    %v301 = vpack.c.b16 %v254, %v253
    %v302 = vpack.c.b16 %v256, %v255
    %v303 = vpack.c.b16 %v258, %v257
    %v304 = vpack.c.b16 %v260, %v259
    %v305 = vpack.c.b16 %v262, %v261
    %v306 = vpack.c.b16 %v264, %v263
    %v307 = vpack.c.b16 %v266, %v265
    %v308 = vpack.c.b16 %v268, %v267
    %v309 = vpack.c.b16 %v270, %v269
    %v310 = vpack.c.b16 %v272, %v271
    %v311 = vpack.c.b16 %v274, %v273
    %v312 = vpack.c.b16 %v276, %v275
    %v313 = vpack.c.b16 %v278, %v277
    %v314 = vpack.c.b16 %v280, %v279
    %v315 = vpack.c.b16 %v282, %v281
    %v316 = vpack.c.b16 %v284, %v283
    %v317 = vpack.c.b16 %v286, %v285
    %v318 = vpack.c.b16 %v288, %v287
    %v319 = vpack.c.b16 %v290, %v289
    %v320 = vpack.c.b16 %v292, %v291
    %v321 = vpack.c.b16 %v294, %v293
    %v322 = vpack.c.b16 %v296, %v295
    %v323 = vpack.c.b16 %v298, %v297
    %v324 = vpack.c.b16 %v300, %v299
    %349 = vmatprep.subr.bf16.mxu0 0
    %350 = vmatpush1.bf16.msra.mxu0 %v301
    %351 = vmatprep.subr.bf16.mxu0 0
    %352 = vmatpush1.bf16.msra.mxu0 %v302
    %353 = vmatprep.subr.bf16.mxu0 0
    %354 = vmatpush1.bf16.msra.mxu0 %v303
    %355 = vmatprep.subr.bf16.mxu0 0
    %356 = vmatpush1.bf16.msra.mxu0 %v304
    %357 = vmatprep.subr.bf16.mxu0 0
    %358 = vmatpush1.bf16.msra.mxu0 %v305
    %359 = vmatprep.subr.bf16.mxu0 0
    %360 = vmatpush1.bf16.msra.mxu0 %v306
    %361 = vmatprep.subr.bf16.mxu0 0
    %362 = vmatpush1.bf16.msra.mxu0 %v307
    %363 = vmatprep.subr.bf16.mxu0 0
    %364 = vmatpush1.bf16.msra.mxu0 %v308
    %365 = vmatprep.subr.bf16.mxu0 0
    %366 = vmatpush1.bf16.msra.mxu0 %v309
    %367 = vmatprep.subr.bf16.mxu0 0
    %368 = vmatpush1.bf16.msra.mxu0 %v310
    %369 = vmatprep.subr.bf16.mxu0 0
    %370 = vmatpush1.bf16.msra.mxu0 %v311
    %371 = vmatprep.subr.bf16.mxu0 0
    %372 = vmatpush1.bf16.msra.mxu0 %v312
    %373 = vmatprep.subr.bf16.mxu0 0
    %374 = vmatpush1.bf16.msra.mxu0 %v313
    %375 = vmatprep.subr.bf16.mxu0 0
    %376 = vmatpush1.bf16.msra.mxu0 %v314
    %377 = vmatprep.subr.bf16.mxu0 0
    %378 = vmatpush1.bf16.msra.mxu0 %v315
    %379 = vmatprep.subr.bf16.mxu0 0
    %380 = vmatpush1.bf16.msra.mxu0 %v316
    %381 = vmatprep.mubr.bf16.mxu0 %v145
    %382 = vmatmul.mubr.bf16.gmra.mrb[0].mxu0 %v144
    %v383 = vpop.f32.mrb[0].mxu0
    %v384 = vadd.f32 %v203, %v383
    %v385 = vpop.f32.mrb[0].mxu0
    %v386 = vpop.f32.mrb[0].mxu0
    %v387 = vadd.f32 %v203, %v386
    %v388 = vpop.f32.mrb[0].mxu0
    %389 = vmatprep.mubr.bf16.mxu0 %v148
    %390 = vmatmul.mubr.bf16.gmra.mrb[0].mxu0 %v147
    %v391 = vpop.f32.mrb[0].mxu0
    %v392 = vadd.f32 %v203, %v391
    %v393 = vpop.f32.mrb[0].mxu0
    %v394 = vpop.f32.mrb[0].mxu0
    %v395 = vadd.f32 %v203, %v394
    %v396 = vpop.f32.mrb[0].mxu0
    %397 = vdwg.mxu0
    %398 = vmatprep.subr.bf16.mxu0 0
    %399 = vmatpush1.bf16.msra.mxu0 %v317
    %400 = vmatprep.subr.bf16.mxu0 0
    %401 = vmatpush1.bf16.msra.mxu0 %v318
    %402 = vmatprep.subr.bf16.mxu0 0
    %403 = vmatpush1.bf16.msra.mxu0 %v319
    %404 = vmatprep.subr.bf16.mxu0 0
    %405 = vmatpush1.bf16.msra.mxu0 %v320
    %406 = vmatprep.subr.bf16.mxu0 0
    %407 = vmatpush1.bf16.msra.mxu0 %v321
    %408 = vmatprep.subr.bf16.mxu0 0
    %409 = vmatpush1.bf16.msra.mxu0 %v322
    %410 = vmatprep.subr.bf16.mxu0 0
    %411 = vmatpush1.bf16.msra.mxu0 %v323
    %412 = vmatprep.subr.bf16.mxu0 0
    %413 = vmatpush1.bf16.msra.mxu0 %v324
    %414 = vmatprep.subr.bf16.mxu0 0
    %415 = vmatpush1.bf16.msra.mxu0 0
    %416 = vmatprep.subr.bf16.mxu0 0
    %417 = vmatpush1.bf16.msra.mxu0 0
    %418 = vmatprep.subr.bf16.mxu0 0
    %419 = vmatpush1.bf16.msra.mxu0 0
    %420 = vmatprep.subr.bf16.mxu0 0
    %421 = vmatpush1.bf16.msra.mxu0 0
    %422 = vmatprep.subr.bf16.mxu0 0
    %423 = vmatpush1.bf16.msra.mxu0 0
    %424 = vmatprep.subr.bf16.mxu0 0
    %425 = vmatpush1.bf16.msra.mxu0 0
    %426 = vmatprep.subr.bf16.mxu0 0
    %427 = vmatpush1.bf16.msra.mxu0 0
    %428 = vmatprep.subr.bf16.mxu0 0
    %429 = vmatpush1.bf16.msra.mxu0 0
    %430 = vmatprep.mubr.bf16.mxu0 0
    %431 = vmatmul.mubr.bf16.gmra.mrb[0].mxu0 %v146
    %v432 = vpop.f32.mrb[0].mxu0
    %v433 = vadd.f32 %v384, %v432
    %v434 = vpop.f32.mrb[0].mxu0
    %v435 = vpop.f32.mrb[0].mxu0
    %v436 = vadd.f32 %v387, %v435
    %v437 = vpop.f32.mrb[0].mxu0
    %438 = vmatprep.mubr.bf16.mxu0 0
    %439 = vmatmul.mubr.bf16.gmra.mrb[0].mxu0 %v149
    %v440 = vpop.f32.mrb[0].mxu0
    %v441 = vadd.f32 %v392, %v440
    %v442 = vpop.f32.mrb[0].mxu0
    %v443 = vpop.f32.mrb[0].mxu0
    %v444 = vadd.f32 %v395, %v443
    %v445 = vpop.f32.mrb[0].mxu0
    %446 = vdwg.mxu0
    %v447 = vmax.f32 %v433, 0.0
    %v448 = vmax.f32 %v436, 0.0
    %v449 = vmax.f32 %v441, 0.0
    %v450 = vmax.f32 %v444, 0.0
    %v451 = vrot.slane %v447, 7
    %v452 = vrot.slane %v448, 7
    %v453 = vrot.slane %v449, 7
    %v454 = vrot.slane %v450, 7
    %v455 = vsel %vm82, %v453, %v454
    %v456 = vsel %vm82, %v452, %v453
    %v457 = vsel %vm82, %v451, %v452
    %v458 = vsel %vm82, %v454, %v451
    %v459 = vmul.f32 %v458, %v90
    %v460 = vmul.f32 %v457, %v95
    %v461 = vmul.f32 %v456, %v100
    %v462 = vmul.f32 %v455, %v105
    %v463 = vrot.slane %v447, 1
    %v464 = vrot.slane %v448, 1
    %v465 = vrot.slane %v449, 1
    %v466 = vrot.slane %v450, 1
    %v467 = vsel %vm115, %v465, %v466
    %v468 = vsel %vm115, %v464, %v465
    %v469 = vsel %vm115, %v463, %v464
    %v470 = vsel %vm115, %v466, %v463
    %v471 = vmul.f32 %v469, %v123
    %v472 = vmul.f32 %v468, %v128
    %v473 = vmul.f32 %v467, %v133
    %v474 = vmul.f32 %v470, %v138
    %v475 = vpack.c.bf16 %v460, %v459
    %v476 = vpack.c.bf16 %v448, %v447
    %v477 = vpack.c.bf16 %v472, %v471
    %v478 = vpack.c.bf16 %v462, %v461
    %v479 = vpack.c.bf16 %v450, %v449
    %v480 = vpack.c.bf16 %v474, %v473
    %v481 = vld [vmem:[#allocation6] sm:$0xf]
    %v482 = vld [vmem:[#allocation6 + $0x4] sm:$0xf]
    %v483 = vld [vmem:[#allocation6 + $0x8] sm:$0xf]
    %v484 = vld [vmem:[#allocation6 + $0xc] sm:$0xf]
    %v485 = vld [vmem:[#allocation6 + $0x10] sm:$0xf]
    %v486 = vld [vmem:[#allocation6 + $0x14] sm:$0xf]
    %v487 = vld [vmem:[#allocation6 + $0x18] sm:$0xf]
    %v488 = vld [vmem:[#allocation6 + $0x1c] sm:$0xf]
    %v489 = vld [vmem:[#allocation6 + $0x20] sm:$0xf]
    %v490 = vld [vmem:[#allocation6 + $0x24] sm:$0xf]
    %v491 = vld [vmem:[#allocation6 + $0x28] sm:$0xf]
    %v492 = vld [vmem:[#allocation6 + $0x2c] sm:$0xf]
    %v493 = vld [vmem:[#allocation6 + $0x30] sm:$0xf]
    %v494 = vld [vmem:[#allocation6 + $0x34] sm:$0xf]
    %v495 = vld [vmem:[#allocation6 + $0x38] sm:$0xf]
    %v496 = vld [vmem:[#allocation6 + $0x3c] sm:$0xf]
    %v497 = vld [vmem:[#allocation6 + $0x40] sm:$0xf]
    %v498 = vld [vmem:[#allocation6 + $0x44] sm:$0xf]
    %v499 = vld [vmem:[#allocation6 + $0x48] sm:$0xf]
    %v500 = vld [vmem:[#allocation6 + $0x4c] sm:$0xf]
    %v501 = vld [vmem:[#allocation6 + $0x50] sm:$0xf]
    %v502 = vld [vmem:[#allocation6 + $0x54] sm:$0xf]
    %v503 = vld [vmem:[#allocation6 + $0x58] sm:$0xf]
    %v504 = vld [vmem:[#allocation6 + $0x5c] sm:$0xf]
    %v505 = vld [vmem:[#allocation6 + $0x60] sm:$0xf]
    %v506 = vld [vmem:[#allocation6 + $0x64] sm:$0xf]
    %v507 = vld [vmem:[#allocation6 + $0x68] sm:$0xf]
    %v508 = vld [vmem:[#allocation6 + $0x6c] sm:$0xf]
    %v509 = vld [vmem:[#allocation6 + $0x70] sm:$0xf]
    %v510 = vld [vmem:[#allocation6 + $0x74] sm:$0xf]
    %v511 = vld [vmem:[#allocation6 + $0x78] sm:$0xf]
    %v512 = vld [vmem:[#allocation6 + $0x7c] sm:$0xf]
    %v513 = vld [vmem:[#allocation6 + $0x80] sm:$0xf]
    %v514 = vld [vmem:[#allocation6 + $0x84] sm:$0xf]
    %v515 = vld [vmem:[#allocation6 + $0x88] sm:$0xf]
    %v516 = vld [vmem:[#allocation6 + $0x8c] sm:$0xf]
    %v517 = vld [vmem:[#allocation6 + $0x90] sm:$0xf]
    %v518 = vld [vmem:[#allocation6 + $0x94] sm:$0xf]
    %v519 = vld [vmem:[#allocation6 + $0x98] sm:$0xf]
    %v520 = vld [vmem:[#allocation6 + $0x9c] sm:$0xf]
    %v521 = vld [vmem:[#allocation6 + $0xa0] sm:$0xf]
    %v522 = vld [vmem:[#allocation6 + $0xa4] sm:$0xf]
    %v523 = vld [vmem:[#allocation6 + $0xa8] sm:$0xf]
    %v524 = vld [vmem:[#allocation6 + $0xac] sm:$0xf]
    %v525 = vld [vmem:[#allocation6 + $0xb0] sm:$0xf]
    %v526 = vld [vmem:[#allocation6 + $0xb4] sm:$0xf]
    %v527 = vld [vmem:[#allocation6 + $0xb8] sm:$0xf]
    %v528 = vld [vmem:[#allocation6 + $0xbc] sm:$0xf]
    %v529 = vld [vmem:[%s7] sm:$0x1]
    %v531 = vlaneseq
    %v532 = vshrl.u32 %v531, 7
    %v533 = vsub.s32 0, %v532
    %v534 = vrot.slane %v529, %v533
    %v584 = vunpack.c.l.b16 %v481
    %v585 = vunpack.c.l.b16 %v482
    %v586 = vunpack.c.l.b16 %v483
    %v587 = vunpack.c.l.b16 %v484
    %v588 = vunpack.c.l.b16 %v485
    %v589 = vunpack.c.l.b16 %v486
    %v590 = vunpack.c.l.b16 %v487
    %v591 = vunpack.c.l.b16 %v488
    %v592 = vunpack.c.l.b16 %v489
    %v593 = vunpack.c.l.b16 %v490
    %v594 = vunpack.c.l.b16 %v491
    %v595 = vunpack.c.l.b16 %v492
    %v596 = vunpack.c.l.b16 %v493
    %v597 = vunpack.c.l.b16 %v494
    %v598 = vunpack.c.l.b16 %v495
    %v599 = vunpack.c.l.b16 %v496
    %v600 = vunpack.c.l.b16 %v497
    %v601 = vunpack.c.l.b16 %v498
    %v602 = vunpack.c.l.b16 %v499
    %v603 = vunpack.c.l.b16 %v500
    %v604 = vunpack.c.l.b16 %v501
    %v605 = vunpack.c.l.b16 %v502
    %v606 = vunpack.c.l.b16 %v503
    %v607 = vunpack.c.l.b16 %v504
    %v608 = vunpack.c.l.b16 %v505
    %v609 = vunpack.c.l.b16 %v506
    %v610 = vunpack.c.l.b16 %v507
    %v611 = vunpack.c.l.b16 %v508
    %v612 = vunpack.c.l.b16 %v509
    %v613 = vunpack.c.l.b16 %v510
    %v614 = vunpack.c.l.b16 %v511
    %v615 = vunpack.c.l.b16 %v512
    %v616 = vunpack.c.l.b16 %v513
    %v617 = vunpack.c.l.b16 %v514
    %v618 = vunpack.c.l.b16 %v515
    %v619 = vunpack.c.l.b16 %v516
    %v620 = vunpack.c.l.b16 %v517
    %v621 = vunpack.c.l.b16 %v518
    %v622 = vunpack.c.l.b16 %v519
    %v623 = vunpack.c.l.b16 %v520
    %v624 = vunpack.c.l.b16 %v521
    %v625 = vunpack.c.l.b16 %v522
    %v626 = vunpack.c.l.b16 %v523
    %v627 = vunpack.c.l.b16 %v524
    %v628 = vunpack.c.l.b16 %v525
    %v629 = vunpack.c.l.b16 %v526
    %v630 = vunpack.c.l.b16 %v527
    %v631 = vunpack.c.l.b16 %v528
    %v632 = vpack.c.b16 %v585, %v584
    %v633 = vpack.c.b16 %v587, %v586
    %v634 = vpack.c.b16 %v589, %v588
    %v635 = vpack.c.b16 %v591, %v590
    %v636 = vpack.c.b16 %v593, %v592
    %v637 = vpack.c.b16 %v595, %v594
    %v638 = vpack.c.b16 %v597, %v596
    %v639 = vpack.c.b16 %v599, %v598
    %v640 = vpack.c.b16 %v601, %v600
    %v641 = vpack.c.b16 %v603, %v602
    %v642 = vpack.c.b16 %v605, %v604
    %v643 = vpack.c.b16 %v607, %v606
    %v644 = vpack.c.b16 %v609, %v608
    %v645 = vpack.c.b16 %v611, %v610
    %v646 = vpack.c.b16 %v613, %v612
    %v647 = vpack.c.b16 %v615, %v614
    %v648 = vpack.c.b16 %v617, %v616
    %v649 = vpack.c.b16 %v619, %v618
    %v650 = vpack.c.b16 %v621, %v620
    %v651 = vpack.c.b16 %v623, %v622
    %v652 = vpack.c.b16 %v625, %v624
    %v653 = vpack.c.b16 %v627, %v626
    %v654 = vpack.c.b16 %v629, %v628
    %v655 = vpack.c.b16 %v631, %v630
    %680 = vmatprep.subr.bf16.mxu0 0
    %681 = vmatpush1.bf16.msra.mxu0 %v632
    %682 = vmatprep.subr.bf16.mxu0 0
    %683 = vmatpush1.bf16.msra.mxu0 %v633
    %684 = vmatprep.subr.bf16.mxu0 0
    %685 = vmatpush1.bf16.msra.mxu0 %v634
    %686 = vmatprep.subr.bf16.mxu0 0
    %687 = vmatpush1.bf16.msra.mxu0 %v635
    %688 = vmatprep.subr.bf16.mxu0 0
    %689 = vmatpush1.bf16.msra.mxu0 %v636
    %690 = vmatprep.subr.bf16.mxu0 0
    %691 = vmatpush1.bf16.msra.mxu0 %v637
    %692 = vmatprep.subr.bf16.mxu0 0
    %693 = vmatpush1.bf16.msra.mxu0 %v638
    %694 = vmatprep.subr.bf16.mxu0 0
    %695 = vmatpush1.bf16.msra.mxu0 %v639
    %696 = vmatprep.subr.bf16.mxu0 0
    %697 = vmatpush1.bf16.msra.mxu0 %v640
    %698 = vmatprep.subr.bf16.mxu0 0
    %699 = vmatpush1.bf16.msra.mxu0 %v641
    %700 = vmatprep.subr.bf16.mxu0 0
    %701 = vmatpush1.bf16.msra.mxu0 %v642
    %702 = vmatprep.subr.bf16.mxu0 0
    %703 = vmatpush1.bf16.msra.mxu0 %v643
    %704 = vmatprep.subr.bf16.mxu0 0
    %705 = vmatpush1.bf16.msra.mxu0 %v644
    %706 = vmatprep.subr.bf16.mxu0 0
    %707 = vmatpush1.bf16.msra.mxu0 %v645
    %708 = vmatprep.subr.bf16.mxu0 0
    %709 = vmatpush1.bf16.msra.mxu0 %v646
    %710 = vmatprep.subr.bf16.mxu0 0
    %711 = vmatpush1.bf16.msra.mxu0 %v647
    %712 = vmatprep.mubr.bf16.mxu0 %v476
    %713 = vmatmul.mubr.bf16.gmra.mrb[0].mxu0 %v475
    %v714 = vpop.f32.mrb[0].mxu0
    %v715 = vadd.f32 %v534, %v714
    %v716 = vpop.f32.mrb[0].mxu0
    %v717 = vpop.f32.mrb[0].mxu0
    %v718 = vadd.f32 %v534, %v717
    %v719 = vpop.f32.mrb[0].mxu0
    %720 = vmatprep.mubr.bf16.mxu0 %v479
    %721 = vmatmul.mubr.bf16.gmra.mrb[0].mxu0 %v478
    %v722 = vpop.f32.mrb[0].mxu0
    %v723 = vadd.f32 %v534, %v722
    %v724 = vpop.f32.mrb[0].mxu0
    %v725 = vpop.f32.mrb[0].mxu0
    %v726 = vadd.f32 %v534, %v725
    %v727 = vpop.f32.mrb[0].mxu0
    %728 = vdwg.mxu0
    %729 = vmatprep.subr.bf16.mxu0 0
    %730 = vmatpush1.bf16.msra.mxu0 %v648
    %731 = vmatprep.subr.bf16.mxu0 0
    %732 = vmatpush1.bf16.msra.mxu0 %v649
    %733 = vmatprep.subr.bf16.mxu0 0
    %734 = vmatpush1.bf16.msra.mxu0 %v650
    %735 = vmatprep.subr.bf16.mxu0 0
    %736 = vmatpush1.bf16.msra.mxu0 %v651
    %737 = vmatprep.subr.bf16.mxu0 0
    %738 = vmatpush1.bf16.msra.mxu0 %v652
    %739 = vmatprep.subr.bf16.mxu0 0
    %740 = vmatpush1.bf16.msra.mxu0 %v653
    %741 = vmatprep.subr.bf16.mxu0 0
    %742 = vmatpush1.bf16.msra.mxu0 %v654
    %743 = vmatprep.subr.bf16.mxu0 0
    %744 = vmatpush1.bf16.msra.mxu0 %v655
    %745 = vmatprep.subr.bf16.mxu0 0
    %746 = vmatpush1.bf16.msra.mxu0 0
    %747 = vmatprep.subr.bf16.mxu0 0
    %748 = vmatpush1.bf16.msra.mxu0 0
    %749 = vmatprep.subr.bf16.mxu0 0
    %750 = vmatpush1.bf16.msra.mxu0 0
    %751 = vmatprep.subr.bf16.mxu0 0
    %752 = vmatpush1.bf16.msra.mxu0 0
    %753 = vmatprep.subr.bf16.mxu0 0
    %754 = vmatpush1.bf16.msra.mxu0 0
    %755 = vmatprep.subr.bf16.mxu0 0
    %756 = vmatpush1.bf16.msra.mxu0 0
    %757 = vmatprep.subr.bf16.mxu0 0
    %758 = vmatpush1.bf16.msra.mxu0 0
    %759 = vmatprep.subr.bf16.mxu0 0
    %760 = vmatpush1.bf16.msra.mxu0 0
    %761 = vmatprep.mubr.bf16.mxu0 0
    %762 = vmatmul.mubr.bf16.gmra.mrb[0].mxu0 %v477
    %v763 = vpop.f32.mrb[0].mxu0
    %v764 = vadd.f32 %v715, %v763
    %v765 = vpop.f32.mrb[0].mxu0
    %v766 = vpop.f32.mrb[0].mxu0
    %v767 = vadd.f32 %v718, %v766
    %v768 = vpop.f32.mrb[0].mxu0
    %769 = vmatprep.mubr.bf16.mxu0 0
    %770 = vmatmul.mubr.bf16.gmra.mrb[0].mxu0 %v480
    %v771 = vpop.f32.mrb[0].mxu0
    %v772 = vadd.f32 %v723, %v771
    %v773 = vpop.f32.mrb[0].mxu0
    %v774 = vpop.f32.mrb[0].mxu0
    %v775 = vadd.f32 %v726, %v774
    %v776 = vpop.f32.mrb[0].mxu0
    %777 = vdwg.mxu0
    %s778 = sld [smem:[#allocation2]]
    %v779 = vstv %s778
    %v780 = vmul.f32 %v779, %v764
    %v781 = vmul.f32 %v779, %v767
    %v782 = vmul.f32 %v779, %v772
    %v783 = vmul.f32 %v779, %v775
    %v784 = vadd.f32 %v60, %v780
    %v785 = vadd.f32 %v61, %v781
    %v786 = vadd.f32 %v62, %v782
    %v787 = vadd.f32 %v63, %v783
    %788 = vst [vmem:[#allocation8] sm:$0xff] %v784
    %789 = vst [vmem:[#allocation8 + $0x8] sm:$0xff] %v785
    %790 = vst [vmem:[#allocation8 + $0x10] sm:$0xff] %v786
    %791 = vst [vmem:[#allocation8 + $0x18] sm:$0xff] %v787
    // Predicated region
    $region42: #{tpu_custom_call.1} parent=1 // pred_check
      _
    $region43: #{tpu_custom_call.1} parent=1 // pred_check_branch
      %793 = sbr.rel (0) target = $region45
    $region44: #{tpu_custom_call.1} parent=1 // pred_region
      %s795 = ssub.s32 512, 512
      %796 = vsyncadd [#allocation5], %s795
      %s797 = sshll.u32 [#allocation8], 4
      %s798 = int_to_ptr.vmem [resolvable:$true] %s797
      %803 = dma.vmem_to_hbm [thread:$0]  %s798, 512, %s8, [#allocation5], 128, 128, 8
    $region45: #{tpu_custom_call.1} parent=1 // pred_fallthru
      _
    // Predicated region
    $region46: #{tpu_custom_call.1} parent=1 // pred_check
      _
    $region47: #{tpu_custom_call.1} parent=1 // pred_check_branch
      %805 = sbr.rel (0) target = $region49
    $region48: #{tpu_custom_call.1} parent=1 // pred_region
      %806 = dma.done [#allocation5], 512
    $region49: #{tpu_custom_call.1} parent=1 // pred_fallthru
      _
    %807 = vsyncpa [#allocation4], 1
    %808 = vsyncpa [#allocation7], 1
    %809 = vsyncpa [#allocation5], 1

</llo_original>
